<compile_context>
chip_gen: v5e
topology: v5e:2x2
jax: 0.10.0
libtpu: 0.0.40
codegen_flags: <defaults>
</compile_context>

<pallas_src>
import functools
import math

import numpy as np
import jax
import jax.numpy as jnp
from jax.experimental import pallas as pl
from jax.experimental.pallas import tpu as pltpu

K = 5          # oriented conv kernel size
BN_EPS = 1e-5  # nn.BatchNorm2d default eps


# ----------------------------- Pallas kernels ------------------------------

def _conv_stats_kernel(p_ref, w_ref, b_ref, s_ref):
    # p_ref: (1, KP, TP)  bf16  im2col patches (contraction on sublanes,
    #                            pixels on lanes)
    # w_ref: (Cout, KP)   bf16  fused (1x1 o 5x5) conv weight
    # b_ref: (Cout, 1)    f32   fused conv bias
    # s_ref: (1, Cout, 2) f32   per-batch [sum, sum-of-squares] accumulator
    @pl.when(pl.program_id(1) == 0)
    def _init():
        s_ref[...] = jnp.zeros_like(s_ref)

    y = jnp.dot(w_ref[...], p_ref[0],
                preferred_element_type=jnp.float32) + b_ref[...]
    # Single-pass BN statistics (sum and sum-of-squares).
    s_ref[0, :, 0:1] += jnp.sum(y, axis=1, keepdims=True)
    s_ref[0, :, 1:2] += jnp.sum(y * y, axis=1, keepdims=True)


def _conv_bn_silu_kernel(p_ref, w_ref, b_ref, sc_ref, sh_ref, o_ref):
    # p_ref:  (1, KP, TP)   bf16
    # w_ref:  (Cout, KP)    bf16
    # b_ref:  (Cout, 1)     f32
    # sc_ref: (Cout, 1)     f32   gamma / sqrt(var + eps)
    # sh_ref: (Cout, 1)     f32   beta - mean * scale
    # o_ref:  (1, Cout, TP) f32   lane-dense NCHW output slab
    y = jnp.dot(w_ref[...], p_ref[0],
                preferred_element_type=jnp.float32) + b_ref[...]
    z = y * sc_ref[...] + sh_ref[...]
    z = z * jax.nn.sigmoid(z)                    # SiLU, f32 elementwise
    o_ref[...] = z[None].astype(o_ref.dtype)


# ------------------------------ tile sizing --------------------------------

def _pick_pixels_per_tile(hw, kp, cout):
    """Largest pixel tile (multiple of 128 dividing H*W) that fits a
    conservative slice of this generation's VMEM."""
    try:
        vmem = pltpu.get_tpu_info().vmem_capacity_bytes
    except Exception:
        vmem = 64 * 1024 * 1024                  # safe floor (v7x per-TC)
    budget = vmem // 8                           # headroom for double-buffering
    bytes_per_px = 2 * kp * 2 + 2 * cout * 4 + 4 * cout * 4
    tp = min(hw, max(128, budget // max(bytes_per_px, 1)))
    if tp >= hw:
        return hw
    tp = (tp // 128) * 128
    while tp > 128 and hw % tp:
        tp -= 128
    return tp if (tp >= 128 and hw % tp == 0) else hw


# ------------------------------ forward pass -------------------------------

@functools.partial(jax.jit, static_argnames=("pixels_per_tile",))
def court_feature_aggregator(x_nchw, params, pixels_per_tile=None):
    """NCHW in -> NCHW out, matching the PyTorch module's forward."""
    N, Cin, H, W = x_nchw.shape
    wf = params["wf"]                            # (Cout, KP) bf16
    Cout, KP = wf.shape
    kkc = K * K * Cin
    assert kkc <= KP
    HW = H * W
    pad = K // 2

    # Layout glue (fused by XLA): halo pad + channel-major im2col so pixels
    # map to TPU lanes.  Contraction index order is (ky, kx, cin), matching
    # the fused weight built in make_params.
    x_pad = jnp.pad(x_nchw, ((0, 0), (0, 0), (pad, pad), (pad, pad)))
    taps = [x_pad[:, :, ky:ky + H, kx:kx + W]
            for ky in range(K) for kx in range(K)]
    patches = jnp.stack(taps, axis=1).reshape(N, kkc, HW)
    patches = jnp.pad(patches, ((0, 0), (0, KP - kkc), (0, 0)))
    patches = patches.astype(jnp.bfloat16)       # (N, KP, H*W)

    TP = pixels_per_tile if pixels_per_tile else _pick_pixels_per_tile(HW, KP, Cout)
    assert HW % TP == 0 and (TP % 128 == 0 or TP == HW)
    n_tiles = HW // TP

    patch_spec = pl.BlockSpec((1, KP, TP), lambda n, t: (n, 0, t))
    w_spec = pl.BlockSpec((Cout, KP), lambda n, t: (0, 0))
    col_spec = pl.BlockSpec((Cout, 1), lambda n, t: (0, 0))

    tile_bytes = TP * (2 * KP * 2 + 2 * Cout * 4 + 4 * Cout * 4) \
        + KP * Cout * 2 + 8 * Cout * 4
    vmem_limit = int(min(max(8 << 20, 2 * tile_bytes), 48 << 20))

    # ---- pass 1: fused conv tile + per-batch BN partial sums --------------
    stats = pl.pallas_call(
        _conv_stats_kernel,
        out_shape=jax.ShapeDtypeStruct((N, Cout, 2), jnp.float32),
        grid=(N, n_tiles),
        in_specs=[patch_spec, w_spec, col_spec],
        out_specs=pl.BlockSpec((1, Cout, 2), lambda n, t: (n, 0, 0)),
        compiler_params=pltpu.CompilerParams(
            dimension_semantics=("parallel", "arbitrary"),
            vmem_limit_bytes=vmem_limit),
    )(patches, wf, params["bf"])

    # ---- tiny global BN finalize (cross-tile / cross-core combine) --------
    cnt = float(N * HW)
    ssum = jnp.sum(stats[:, :, 0], axis=0)       # (Cout,)
    ssq = jnp.sum(stats[:, :, 1], axis=0)
    mean = ssum / cnt
    var = jnp.maximum(ssq / cnt - mean * mean, 0.0)   # biased, train-mode BN
    inv = jax.lax.rsqrt(var + BN_EPS)
    gamma = params["gamma"][:, 0]
    beta = params["beta"][:, 0]
    scale = (gamma * inv)[:, None].astype(jnp.float32)          # (Cout, 1)
    shift = (beta - mean * gamma * inv)[:, None].astype(jnp.float32)

    # ---- pass 2: recompute fused conv tile, BN affine + SiLU, store -------
    out_flat = pl.pallas_call(
        _conv_bn_silu_kernel,
        out_shape=jax.ShapeDtypeStruct((N, Cout, HW), jnp.float32),
        grid=(N, n_tiles),
        in_specs=[patch_spec, w_spec, col_spec, col_spec, col_spec],
        out_specs=pl.BlockSpec((1, Cout, TP), lambda n, t: (n, 0, t)),
        compiler_params=pltpu.CompilerParams(
            dimension_semantics=("parallel", "parallel"),
            vmem_limit_bytes=vmem_limit),
    )(patches, wf, params["bf"], scale, shift)

    # (N, Cout, H*W) is already NCHW memory order.
    return out_flat.reshape(N, Cout, H, W)


# --------------------------- parameter building ----------------------------

def make_params(in_channels, out_channels, num_orientations, key):
    """Deterministic parameters mirroring the PyTorch __init__, with the 5x5
    oriented convs and the 1x1 combine conv fused into one weight."""
    assert out_channels % num_orientations == 0
    cpo = out_channels // num_orientations
    keys = jax.random.split(key, num_orientations + 2)

    fan_in5 = in_channels * K * K
    bound5 = 1.0 / math.sqrt(fan_in5)
    center = K // 2

    w_parts, b_parts = [], []
    for i in range(num_orientations):
        angle = i * (360.0 / num_orientations)
        # np.array(...) makes a WRITABLE copy of the (read-only) jax array.
        w = np.array(jax.random.uniform(keys[i], (cpo, in_channels, K, K),
                                        minval=-bound5, maxval=bound5),
                     dtype=np.float32)
        for y in range(K):
            for x in range(K):
                dy, dx = y - center, x - center
                if dx == 0 and dy == 0:
                    continue   # center tap keeps its Conv2d default init
                pixel_angle = math.atan2(dy, dx) * 180.0 / math.pi
                diff = min(abs(pixel_angle - angle),
                           abs(pixel_angle - angle + 360),
                           abs(pixel_angle - angle - 360))
                w[:, :, y, x] = 0.5 if diff < 30 else -0.1
        w_parts.append(w)
        b_parts.append(np.array(
            jax.random.uniform(jax.random.fold_in(keys[i], 1), (cpo,),
                               minval=-bound5, maxval=bound5),
            dtype=np.float32))

    # Oriented convs concatenated -> (Cout, Cin, K, K); matmul layout
    # (K*K*Cin, Cout) with contraction index order (ky, kx, cin).
    w5 = np.concatenate(w_parts, axis=0)
    w5 = np.transpose(w5, (2, 3, 1, 0)).reshape(K * K * in_channels, out_channels)
    b5 = np.concatenate(b_parts, axis=0)                      # (Cout,)

    bound1 = 1.0 / math.sqrt(out_channels)                    # 1x1 conv fan_in
    w1_torch = np.array(jax.random.uniform(keys[-2], (out_channels, out_channels),
                                           minval=-bound1, maxval=bound1),
                        dtype=np.float32)
    w1 = w1_torch.T                                           # (in, out)
    b1 = np.array(jax.random.uniform(keys[-1], (out_channels,),
                                     minval=-bound1, maxval=bound1),
                  dtype=np.float32)

    # Exact fusion of conv5x5 -> conv1x1 (both linear; BN/SiLU stay after).
    wf = w5 @ w1                                              # (K*K*Cin, Cout)
    bf = b5 @ w1 + b1                                         # (Cout,)

    kkc = K * K * in_channels
    kp = max(128, ((kkc + 127) // 128) * 128)                 # pad contraction
    wf_pad = np.zeros((kp, out_channels), np.float32)
    wf_pad[:kkc] = wf

    return dict(
        wf=jnp.asarray(wf_pad.T, jnp.bfloat16),               # (Cout, KP)
        bf=jnp.asarray(bf[:, None], jnp.float32),             # (Cout, 1)
        gamma=jnp.ones((out_channels, 1), jnp.float32),       # BN affine defaults
        beta=jnp.zeros((out_channels, 1), jnp.float32),
    )


# ----------------------------------- demo ----------------------------------

if __name__ == "__main__":
    key = jax.random.PRNGKey(0)
    k_x, k_p = jax.random.split(key)

    N, Cin, H, W = 2, 4, 16, 16
    Cout, num_orientations = 16, 8

    x = jax.random.normal(k_x, (N, Cin, H, W), dtype=jnp.float32)
    params = make_params(Cin, Cout, num_orientations, k_p)

    # pixels_per_tile=128 -> grid (batch: parallel) x (2 pixel tiles: arbitrary),
    # exercising the cross-tile BN accumulation path even at this toy size.
    out = court_feature_aggregator(x, params, pixels_per_tile=128)
    jax.block_until_ready(out)
    assert out.shape == (N, Cout, H, W)
    assert bool(jnp.all(jnp.isfinite(out)))
    print("KERNEL_OK")
</pallas_src>

<mosaic_0001>
module attributes {stable_mosaic.version = 11 : i64} {
  func.func @_conv_stats_kernel(%arg0: i32, %arg1: i32, %arg2: memref<1x128x128xbf16, #tpu.memory_space<vmem>>, %arg3: memref<16x128xbf16, #tpu.memory_space<vmem>>, %arg4: memref<16x1xf32, #tpu.memory_space<vmem>>, %arg5: memref<1x16x2xf32, #tpu.memory_space<vmem>>) attributes {dimension_semantics = [#tpu.dimension_semantics<parallel>, #tpu.dimension_semantics<arbitrary>], iteration_bounds = array<i64: 2, 2>, scalar_prefetch = 0 : i64, scratch_operands = 0 : i64, tpu.core_type = #tpu.core_type<tc>, window_params = [{transform_indices = @transform_0, window_bounds = array<i64: 1, 128, 128>}, {pipeline_mode = #tpu.pipeline_mode<synchronous>, transform_indices = @transform_1, window_bounds = array<i64: 16, 128>}, {pipeline_mode = #tpu.pipeline_mode<synchronous>, transform_indices = @transform_2, window_bounds = array<i64: 16, 1>}, {transform_indices = @transform_3, window_bounds = array<i64: 1, 16, 2>}]} {
    %c0_i32 = arith.constant 0 : i32
    %0 = arith.cmpi eq, %arg1, %c0_i32 : i32
    %1 = arith.extui %0 : i1 to i32
    %c0_i32_0 = arith.constant 0 : i32
    %2 = arith.cmpi ne, %1, %c0_i32_0 : i32
    scf.if %2 {
      %cst_20 = arith.constant 0.000000e+00 : f32
      %27 = vector.broadcast %cst_20 : f32 to vector<1x16x2xf32>
      %c0_21 = arith.constant 0 : index
      %c0_22 = arith.constant 0 : index
      %c0_23 = arith.constant 0 : index
      %28 = vector.load %arg5[%c0_21, %c0_22, %c0_23] : memref<1x16x2xf32, #tpu.memory_space<vmem>>, vector<1x16x2xf32>
      tpu.vector_store %arg5[%c0_21, %c0_22, %c0_23], %27 {strides = array<i32>} : memref<1x16x2xf32, #tpu.memory_space<vmem>>, vector<1x16x2xf32>,
    } else {
    }
    %c0 = arith.constant 0 : index
    %c0_1 = arith.constant 0 : index
    %3 = vector.load %arg3[%c0, %c0_1] : memref<16x128xbf16, #tpu.memory_space<vmem>>, vector<16x128xbf16>
    %c0_2 = arith.constant 0 : index
    %c0_3 = arith.constant 0 : index
    %c0_4 = arith.constant 0 : index
    %4 = vector.load %arg2[%c0_2, %c0_3, %c0_4] : memref<1x128x128xbf16, #tpu.memory_space<vmem>>, vector<1x128x128xbf16>
    %5 = vector.shape_cast %4 : vector<1x128x128xbf16> to vector<128x128xbf16>
    %cst = arith.constant dense<0.000000e+00> : vector<16x128xf32>
    %6 = tpu.matmul %3, %5, %cst {dimension_numbers = #tpu.dot_dimension_numbers<[1], [0], [0], [1], [0, 0, 1, 1], [], []>} : vector<16x128xbf16>, vector<128x128xbf16>, vector<16x128xf32> -> vector<16x128xf32>
    %c0_5 = arith.constant 0 : index
    %c0_6 = arith.constant 0 : index
    %7 = vector.load %arg4[%c0_5, %c0_6] : memref<16x1xf32, #tpu.memory_space<vmem>>, vector<16x1xf32>
    %8 = vector.broadcast %7 : vector<16x1xf32> to vector<16x128xf32>
    %9 = arith.addf %6, %8 : vector<16x128xf32>
    %c0_7 = arith.constant 0 : index
    %c0_8 = arith.constant 0 : index
    %c0_9 = arith.constant 0 : index
    %10 = vector.load %arg5[%c0_7, %c0_8, %c0_9] : memref<1x16x2xf32, #tpu.memory_space<vmem>>, vector<1x16x1xf32>
    %11 = vector.shape_cast %10 : vector<1x16x1xf32> to vector<16x1xf32>
    %cst_10 = arith.constant dense<0.000000e+00> : vector<16xf32>
    %12 = vector.multi_reduction <add>, %9, %cst_10 [1] : vector<16x128xf32> to vector<16xf32>
    %13 = vector.shape_cast %12 : vector<16xf32> to vector<16x1xf32>
    %14 = arith.addf %11, %13 : vector<16x1xf32>
    %c0_11 = arith.constant 0 : index
    %c0_12 = arith.constant 0 : index
    %c0_13 = arith.constant 0 : index
    %15 = vector.load %arg5[%c0_11, %c0_12, %c0_13] : memref<1x16x2xf32, #tpu.memory_space<vmem>>, vector<1x16x1xf32>
    %16 = vector.shape_cast %15 : vector<1x16x1xf32> to vector<16x1xf32>
    %17 = vector.shape_cast %14 : vector<16x1xf32> to vector<1x16x1xf32>
    tpu.vector_store %arg5[%c0_11, %c0_12, %c0_13], %17 {strides = array<i32>} : memref<1x16x2xf32, #tpu.memory_space<vmem>>, vector<1x16x1xf32>,
    %c0_14 = arith.constant 0 : index
    %c0_15 = arith.constant 0 : index
    %c1 = arith.constant 1 : index
    %18 = vector.load %arg5[%c0_14, %c0_15, %c1] : memref<1x16x2xf32, #tpu.memory_space<vmem>>, vector<1x16x1xf32>
    %19 = vector.shape_cast %18 : vector<1x16x1xf32> to vector<16x1xf32>
    %20 = arith.mulf %9, %9 : vector<16x128xf32>
    %cst_16 = arith.constant dense<0.000000e+00> : vector<16xf32>
    %21 = vector.multi_reduction <add>, %20, %cst_16 [1] : vector<16x128xf32> to vector<16xf32>
    %22 = vector.shape_cast %21 : vector<16xf32> to vector<16x1xf32>
    %23 = arith.addf %19, %22 : vector<16x1xf32>
    %c0_17 = arith.constant 0 : index
    %c0_18 = arith.constant 0 : index
    %c1_19 = arith.constant 1 : index
    %24 = vector.load %arg5[%c0_17, %c0_18, %c1_19] : memref<1x16x2xf32, #tpu.memory_space<vmem>>, vector<1x16x1xf32>
    %25 = vector.shape_cast %24 : vector<1x16x1xf32> to vector<16x1xf32>
    %26 = vector.shape_cast %23 : vector<16x1xf32> to vector<1x16x1xf32>
    tpu.vector_store %arg5[%c0_17, %c0_18, %c1_19], %26 {strides = array<i32>} : memref<1x16x2xf32, #tpu.memory_space<vmem>>, vector<1x16x1xf32>,
    return
  }
  func.func @transform_0(%arg0: i32, %arg1: i32) -> (i32, i32, i32) {
    %c0_i32 = arith.constant 0 : i32
    %c0_i32_0 = arith.constant 0 : i32
    return %arg0, %c0_i32, %arg1 : i32, i32, i32
  }
  func.func @transform_1(%arg0: i32, %arg1: i32) -> (i32, i32) {
    %c0_i32 = arith.constant 0 : i32
    %c0_i32_0 = arith.constant 0 : i32
    %c0_i32_1 = arith.constant 0 : i32
    return %c0_i32, %c0_i32_0 : i32, i32
  }
  func.func @transform_2(%arg0: i32, %arg1: i32) -> (i32, i32) {
    %c0_i32 = arith.constant 0 : i32
    %c0_i32_0 = arith.constant 0 : i32
    %c0_i32_1 = arith.constant 0 : i32
    return %c0_i32, %c0_i32_0 : i32, i32
  }
  func.func @transform_3(%arg0: i32, %arg1: i32) -> (i32, i32, i32) {
    %c0_i32 = arith.constant 0 : i32
    %c0_i32_0 = arith.constant 0 : i32
    %c0_i32_1 = arith.constant 0 : i32
    return %arg0, %c0_i32, %c0_i32_0 : i32, i32, i32
  }
}

module attributes {stable_mosaic.version = 11 : i64} {
  func.func @_conv_bn_silu_kernel(%arg0: i32, %arg1: i32, %arg2: memref<1x128x128xbf16, #tpu.memory_space<vmem>>, %arg3: memref<16x128xbf16, #tpu.memory_space<vmem>>, %arg4: memref<16x1xf32, #tpu.memory_space<vmem>>, %arg5: memref<16x1xf32, #tpu.memory_space<vmem>>, %arg6: memref<16x1xf32, #tpu.memory_space<vmem>>, %arg7: memref<1x16x128xf32, #tpu.memory_space<vmem>>) attributes {dimension_semantics = [#tpu.dimension_semantics<parallel>, #tpu.dimension_semantics<parallel>], iteration_bounds = array<i64: 2, 2>, scalar_prefetch = 0 : i64, scratch_operands = 0 : i64, tpu.core_type = #tpu.core_type<tc>, window_params = [{transform_indices = @transform_0, window_bounds = array<i64: 1, 128, 128>}, {pipeline_mode = #tpu.pipeline_mode<synchronous>, transform_indices = @transform_1, window_bounds = array<i64: 16, 128>}, {pipeline_mode = #tpu.pipeline_mode<synchronous>, transform_indices = @transform_2, window_bounds = array<i64: 16, 1>}, {pipeline_mode = #tpu.pipeline_mode<synchronous>, transform_indices = @transform_3, window_bounds = array<i64: 16, 1>}, {pipeline_mode = #tpu.pipeline_mode<synchronous>, transform_indices = @transform_4, window_bounds = array<i64: 16, 1>}, {transform_indices = @transform_5, window_bounds = array<i64: 1, 16, 128>}]} {
    %c0 = arith.constant 0 : index
    %c0_0 = arith.constant 0 : index
    %0 = vector.load %arg3[%c0, %c0_0] : memref<16x128xbf16, #tpu.memory_space<vmem>>, vector<16x128xbf16>
    %c0_1 = arith.constant 0 : index
    %c0_2 = arith.constant 0 : index
    %c0_3 = arith.constant 0 : index
    %1 = vector.load %arg2[%c0_1, %c0_2, %c0_3] : memref<1x128x128xbf16, #tpu.memory_space<vmem>>, vector<1x128x128xbf16>
    %2 = vector.shape_cast %1 : vector<1x128x128xbf16> to vector<128x128xbf16>
    %cst = arith.constant dense<0.000000e+00> : vector<16x128xf32>
    %3 = tpu.matmul %0, %2, %cst {dimension_numbers = #tpu.dot_dimension_numbers<[1], [0], [0], [1], [0, 0, 1, 1], [], []>} : vector<16x128xbf16>, vector<128x128xbf16>, vector<16x128xf32> -> vector<16x128xf32>
    %c0_4 = arith.constant 0 : index
    %c0_5 = arith.constant 0 : index
    %4 = vector.load %arg4[%c0_4, %c0_5] : memref<16x1xf32, #tpu.memory_space<vmem>>, vector<16x1xf32>
    %5 = vector.broadcast %4 : vector<16x1xf32> to vector<16x128xf32>
    %6 = arith.addf %3, %5 : vector<16x128xf32>
    %c0_6 = arith.constant 0 : index
    %c0_7 = arith.constant 0 : index
    %7 = vector.load %arg5[%c0_6, %c0_7] : memref<16x1xf32, #tpu.memory_space<vmem>>, vector<16x1xf32>
    %8 = vector.broadcast %7 : vector<16x1xf32> to vector<16x128xf32>
    %9 = arith.mulf %6, %8 : vector<16x128xf32>
    %c0_8 = arith.constant 0 : index
    %c0_9 = arith.constant 0 : index
    %10 = vector.load %arg6[%c0_8, %c0_9] : memref<16x1xf32, #tpu.memory_space<vmem>>, vector<16x1xf32>
    %11 = vector.broadcast %10 : vector<16x1xf32> to vector<16x128xf32>
    %12 = arith.addf %9, %11 : vector<16x128xf32>
    %13 = arith.negf %12 : vector<16x128xf32>
    %14 = math.exp %13 : vector<16x128xf32>
    %cst_10 = arith.constant 1.000000e+00 : f32
    %15 = vector.broadcast %cst_10 : f32 to vector<16x128xf32>
    %16 = arith.addf %15, %14 : vector<16x128xf32>
    %17 = arith.divf %15, %16 : vector<16x128xf32>
    %18 = arith.mulf %12, %17 : vector<16x128xf32>
    %19 = vector.shape_cast %18 : vector<16x128xf32> to vector<1x16x128xf32>
    %c0_11 = arith.constant 0 : index
    %c0_12 = arith.constant 0 : index
    %c0_13 = arith.constant 0 : index
    %20 = vector.load %arg7[%c0_11, %c0_12, %c0_13] : memref<1x16x128xf32, #tpu.memory_space<vmem>>, vector<1x16x128xf32>
    tpu.vector_store %arg7[%c0_11, %c0_12, %c0_13], %19 {strides = array<i32>} : memref<1x16x128xf32, #tpu.memory_space<vmem>>, vector<1x16x128xf32>,
    return
  }
  func.func @transform_0(%arg0: i32, %arg1: i32) -> (i32, i32, i32) {
    %c0_i32 = arith.constant 0 : i32
    %c0_i32_0 = arith.constant 0 : i32
    return %arg0, %c0_i32, %arg1 : i32, i32, i32
  }
  func.func @transform_1(%arg0: i32, %arg1: i32) -> (i32, i32) {
    %c0_i32 = arith.constant 0 : i32
    %c0_i32_0 = arith.constant 0 : i32
    %c0_i32_1 = arith.constant 0 : i32
    return %c0_i32, %c0_i32_0 : i32, i32
  }
  func.func @transform_2(%arg0: i32, %arg1: i32) -> (i32, i32) {
    %c0_i32 = arith.constant 0 : i32
    %c0_i32_0 = arith.constant 0 : i32
    %c0_i32_1 = arith.constant 0 : i32
    return %c0_i32, %c0_i32_0 : i32, i32
  }
  func.func @transform_3(%arg0: i32, %arg1: i32) -> (i32, i32) {
    %c0_i32 = arith.constant 0 : i32
    %c0_i32_0 = arith.constant 0 : i32
    %c0_i32_1 = arith.constant 0 : i32
    return %c0_i32, %c0_i32_0 : i32, i32
  }
  func.func @transform_4(%arg0: i32, %arg1: i32) -> (i32, i32) {
    %c0_i32 = arith.constant 0 : i32
    %c0_i32_0 = arith.constant 0 : i32
    %c0_i32_1 = arith.constant 0 : i32
    return %c0_i32, %c0_i32_0 : i32, i32
  }
  func.func @transform_5(%arg0: i32, %arg1: i32) -> (i32, i32, i32) {
    %c0_i32 = arith.constant 0 : i32
    %c0_i32_0 = arith.constant 0 : i32
    return %arg0, %c0_i32, %arg1 : i32, i32, i32
  }
}

</mosaic_0001>

<llo_original>
// kernel: court_feature_aggregator.2
$region0: #{court_feature_aggregator.2}
  #allocation0 [shape = 'u32[]', space=smem, size = 0x4, offset = 0x4, fixed_abs, tag = 'smem constant byte address 0x4 - core index']
  #allocation1 [shape = 'u32[72,128]{1,0:T(1,128)}', space=vmem, size = 0x9000, scoped, tag = 'internal scratch']
  %s0 = inlined_call_operand.vmem [shape: bf16[2,128,256], index: 0, kind: input, shape index: {}]
  %s1 = inlined_call_operand.vmem [shape: bf16[16,128], index: 1, kind: input, shape index: {}]
  %s2 = inlined_call_operand.vmem [shape: f32[16,1], index: 2, kind: input, shape index: {}]
  %s3 = inlined_call_operand.vmem [shape: f32[2,16,2], index: 3, kind: output, shape index: {}]
  %s4 = sld [smem:[#allocation0]]
  $region90: #{court_feature_aggregator.2} parent=0
    _
  %s6 = ssub.s32 1, %s4
  %s7 = scalar_select 0, %s6, %s4
  $region1: #{court_feature_aggregator.2} parent=0
    #allocation2 [shape = 'u8[65536]{0}', space=vmem, size = 0x10000, scoped, tag = 'input window, operand 0']
    loop: start=0, step=1, limit=6
    $region2: #{court_feature_aggregator.2} parent=1 // loop_pre_header
      _
    $region3: #{court_feature_aggregator.2} parent=1 // loop_header
      %s9 = sphi 0, %s13
      %p10 = scmp.ge.s32.totalorder %s9, 6
      %s16 = sphi 0, %s28
      %s17 = sphi 0, %s24
      %s18 = sphi 0, %s16
      %s19 = sphi 0, %s17
      %s20 = sphi 0, %s18
      %s21 = sphi 0, %s19
      %s33 = sphi 0, %s35
      %s36 = sphi 0, %s33
      %s37 = sphi 0, %s36
      %s53 = sphi 0, %s37
      %s57 = sphi 0, %s57
      %s59 = sphi 0, %s57
      %s60 = sphi 0, %s59
      %s74 = sphi 0, %s60
      %s78 = sphi 0, %s78
      %s80 = sphi 0, %s78
      %s81 = sphi 0, %s80
      %s95 = sphi 0, %s81
      %s101 = sphi 0, %s103
      %s104 = sphi 0, %s101
      %s105 = sphi 0, %s104
      %s121 = sphi 0, %s105
    $region4: #{court_feature_aggregator.2} parent=1 // loop_header_branch
      %12 = sbr.rel (%p10) target = $region8
    $region5: #{court_feature_aggregator.2} parent=1 // loop_body
      %s14 = ssub.s32 %s9, 1
      %s15 = ssub.s32 %s9, 2
      %s22 = sadd.s32 1, %s17
      %p23 = scmp.ge.s32.totalorder %s22, 2
      %s24 = scalar_select %p23, 0, %s22
      %s25 = sadd.s32 1, %s16
      %s26 = scalar_select %p23, %s25, %s16
      %p27 = scmp.ge.s32.totalorder %s26, 2
      %s28 = scalar_select %p27, 0, %s26
      %s29 = ssub.s32 %s16, %s28
      %s30 = ssub.s32 %s17, %s24
      %s31 = sor.u32 %s29, %s30
      %p32 = scmp.eq.s32.totalorder %s31, 0
      %s34 = sadd.s32 %s33, 1
      %s35 = scalar_select %p32, %s33, %s34
      %p38 = pneg %p32
      %p39 = scmp.eq.s32.totalorder %s9, 3
      %p40 = por %p38, %p39
      %p41 = scmp.ne.s32.totalorder %s33, %s36
      %p42 = scmp.eq.s32.totalorder %s9, 0
      %p43 = por %p41, %p42
      %p44 = scmp.ne.s32.totalorder %s33, %s36
      %p45 = scmp.eq.s32.totalorder %s14, 3
      %p46 = por %p44, %p45
      %p47 = scmp.ne.s32.totalorder %s36, %s37
      %p48 = scmp.eq.s32.totalorder %s14, 0
      %p49 = por %p47, %p48
      %p50 = scmp.ne.s32.totalorder %s36, %s37
      %p51 = scmp.eq.s32.totalorder %s15, 3
      %p52 = por %p50, %p51
      %p54 = scmp.ne.s32.totalorder %s37, %s53
      %p55 = scmp.eq.s32.totalorder %s15, 0
      %p56 = por %p54, %p55
      %s58 = sadd.s32 %s57, 1
      %p61 = scmp.eq.s32.totalorder %s9, 3
      %p62 = scmp.ne.s32.totalorder %s57, %s59
      %p63 = scmp.eq.s32.totalorder %s9, 0
      %p64 = por %p62, %p63
      %p65 = scmp.ne.s32.totalorder %s57, %s59
      %p66 = scmp.eq.s32.totalorder %s14, 3
      %p67 = por %p65, %p66
      %p68 = scmp.ne.s32.totalorder %s59, %s60
      %p69 = scmp.eq.s32.totalorder %s14, 0
      %p70 = por %p68, %p69
      %p71 = scmp.ne.s32.totalorder %s59, %s60
      %p72 = scmp.eq.s32.totalorder %s15, 3
      %p73 = por %p71, %p72
      %p75 = scmp.ne.s32.totalorder %s60, %s74
      %p76 = scmp.eq.s32.totalorder %s15, 0
      %p77 = por %p75, %p76
      %s79 = sadd.s32 %s78, 1
      %p82 = scmp.eq.s32.totalorder %s9, 3
      %p83 = scmp.ne.s32.totalorder %s78, %s80
      %p84 = scmp.eq.s32.totalorder %s9, 0
      %p85 = por %p83, %p84
      %p86 = scmp.ne.s32.totalorder %s78, %s80
      %p87 = scmp.eq.s32.totalorder %s14, 3
      %p88 = por %p86, %p87
      %p89 = scmp.ne.s32.totalorder %s80, %s81
      %p90 = scmp.eq.s32.totalorder %s14, 0
      %p91 = por %p89, %p90
      %p92 = scmp.ne.s32.totalorder %s80, %s81
      %p93 = scmp.eq.s32.totalorder %s15, 3
      %p94 = por %p92, %p93
      %p96 = scmp.ne.s32.totalorder %s81, %s95
      %p97 = scmp.eq.s32.totalorder %s15, 0
      %p98 = por %p96, %p97
      %s99 = ssub.s32 %s16, %s28
      %p100 = scmp.eq.s32.totalorder %s99, 0
      %s102 = sadd.s32 %s101, 1
      %s103 = scalar_select %p100, %s101, %s102
      %p106 = pneg %p100
      %p107 = scmp.eq.s32.totalorder %s9, 3
      %p108 = por %p106, %p107
      %p109 = scmp.ne.s32.totalorder %s101, %s104
      %p110 = scmp.eq.s32.totalorder %s9, 0
      %p111 = por %p109, %p110
      %p112 = scmp.ne.s32.totalorder %s101, %s104
      %p113 = scmp.eq.s32.totalorder %s14, 3
      %p114 = por %p112, %p113
      %p115 = scmp.ne.s32.totalorder %s104, %s105
      %p116 = scmp.eq.s32.totalorder %s14, 0
      %p117 = por %p115, %p116
      %p118 = scmp.ne.s32.totalorder %s104, %s105
      %p119 = scmp.eq.s32.totalorder %s15, 3
      %p120 = por %p118, %p119
      %p122 = scmp.ne.s32.totalorder %s105, %s121
      %p123 = scmp.eq.s32.totalorder %s15, 0
      %p124 = por %p122, %p123
      %p125 = scmp.le.s32.totalorder 1, %s9
      %p126 = scmp.lt.s32.totalorder %s9, 5
      %p127 = pnand %p125, %p126
      %p128 = pneg %p127
      // Predicated region
      $region9: #{court_feature_aggregator.2} parent=5 // pred_check
        _
      $region10: #{court_feature_aggregator.2} parent=5 // pred_check_branch
        %130 = sbr.rel (%p127) target = $region12
      $region11: #{court_feature_aggregator.2} parent=5 // pred_region
        %s131 = ssub.s32 %s9, 1
        // Predicated region
        $region13: #{court_feature_aggregator.2} parent=11 // pred_check
          %p132 = pneg %p70
        $region14: #{court_feature_aggregator.2} parent=11 // pred_check_branch
          %134 = sbr.rel (%p132) target = $region16
        $region15: #{court_feature_aggregator.2} parent=11 // pred_region
          _
        $region16: #{court_feature_aggregator.2} parent=11 // pred_fallthru
          _
        // Predicated region
        $region17: #{court_feature_aggregator.2} parent=11 // pred_check
          %p135 = pneg %p91
        $region18: #{court_feature_aggregator.2} parent=11 // pred_check_branch
          %137 = sbr.rel (%p135) target = $region20
        $region19: #{court_feature_aggregator.2} parent=11 // pred_region
          _
        $region20: #{court_feature_aggregator.2} parent=11 // pred_fallthru
          _
      $region12: #{court_feature_aggregator.2} parent=5 // pred_fallthru
        _
      %p138 = scmp.lt.s32.totalorder %s9, 4
      // Predicated region
      $region21: #{court_feature_aggregator.2} parent=5 // pred_check
        %p139 = pneg %p138
      $region22: #{court_feature_aggregator.2} parent=5 // pred_check_branch
        %141 = sbr.rel (%p139) target = $region24
      $region23: #{court_feature_aggregator.2} parent=5 // pred_region
        // Predicated region
        $region25: #{court_feature_aggregator.2} parent=23 // pred_check
          %p142 = pneg %p43
        $region26: #{court_feature_aggregator.2} parent=23 // pred_check_branch
          %144 = sbr.rel (%p142) target = $region28
        $region27: #{court_feature_aggregator.2} parent=23 // pred_region
          %s145 = sand.u32 %s33, 1
          %s146 = sand.u32 %s33, 1
          %s147 = smul.addr %s146, 64
          %s148 = scalar_lea.vmem [#allocation2], %s147
          %s149 = smul.addr %s16, 32
          %s150 = sadd.s32 %s17, %s149
          %s151 = smul.addr %s150, 4
          %s152 = scalar_lea.vmem %s0, %s151
          // Predicated region
          $region29: #{court_feature_aggregator.2} parent=27 // pred_check
            _
          $region30: #{court_feature_aggregator.2} parent=27 // pred_check_branch
            %154 = sbr.rel (0) target = $region32
          $region31: #{court_feature_aggregator.2} parent=27 // pred_region
            // Predicated region
            $region33: #{court_feature_aggregator.2} parent=31 // pred_check
              _
            $region34: #{court_feature_aggregator.2} parent=31 // pred_check_branch
              %156 = sbr.rel target = $region36
            $region35: #{court_feature_aggregator.2} parent=31 // pred_region
              // Predicated region
              $region48: #{court_feature_aggregator.2} parent=35 // pred_check
                _
              $region49: #{court_feature_aggregator.2} parent=35 // pred_check_branch
                %202 = sbr.rel (0) target = $region51
              $region50: #{court_feature_aggregator.2} parent=35 // pred_region
                loop: start=0, step=1, limit=1
                $region52: #{court_feature_aggregator.2} parent=50 // loop_pre_header
                  _
                $region53: #{court_feature_aggregator.2} parent=50 // loop_header
                  %s204 = sphi 0, %s208
                  %p205 = scmp.ge.s32.totalorder %s204, 1
                  %s209 = sphi %s152, %s152
                  %s210 = sphi %s148, %s148
                $region54: #{court_feature_aggregator.2} parent=50 // loop_header_branch
                  %207 = sbr.rel (%p205) target = $region58
                $region55: #{court_feature_aggregator.2} parent=50 // loop_body
                  _
                $region56: #{court_feature_aggregator.2} parent=50 // loop_footer
                  %s208 = sadd.s32 1, %s204
                $region57: #{court_feature_aggregator.2} parent=50 // loop_footer_branch
                  %203 = sbr.rel target = $region53
                $region58: #{court_feature_aggregator.2} parent=50 // loop_exit
                  _
                %s212 = ssub.s32 16, 1
                loop: start=0, step=1, limit=1
                $region59: #{court_feature_aggregator.2} parent=50 // loop_pre_header
                  _
                $region60: #{court_feature_aggregator.2} parent=50 // loop_header
                  %s214 = sphi 0, %s218
                  %p215 = scmp.ge.s32.totalorder %s214, 1
                  %s219 = sphi %s152, %s152
                  %s220 = sphi %s148, %s148
                $region61: #{court_feature_aggregator.2} parent=50 // loop_header_branch
                  %217 = sbr.rel (%p215) target = $region65
                $region62: #{court_feature_aggregator.2} parent=50 // loop_body
                  %v221 = vld [vmem:[%s219] sm:%s212]
                  %222 = vst [vmem:[%s220] sm:%s212] %v221
                  %v223 = vld [vmem:[%s219 + $0x8] sm:%s212]
                  %224 = vst [vmem:[%s220 + $0x4] sm:%s212] %v223
                  %v225 = vld [vmem:[%s219 + $0x10] sm:%s212]
                  %226 = vst [vmem:[%s220 + $0x8] sm:%s212] %v225
                  %v227 = vld [vmem:[%s219 + $0x18] sm:%s212]
                  %228 = vst [vmem:[%s220 + $0xc] sm:%s212] %v227
                  %v229 = vld [vmem:[%s219 + $0x20] sm:%s212]
                  %230 = vst [vmem:[%s220 + $0x10] sm:%s212] %v229
                  %v231 = vld [vmem:[%s219 + $0x28] sm:%s212]
                  %232 = vst [vmem:[%s220 + $0x14] sm:%s212] %v231
                  %v233 = vld [vmem:[%s219 + $0x30] sm:%s212]
                  %234 = vst [vmem:[%s220 + $0x18] sm:%s212] %v233
                  %v235 = vld [vmem:[%s219 + $0x38] sm:%s212]
                  %236 = vst [vmem:[%s220 + $0x1c] sm:%s212] %v235
                  %v237 = vld [vmem:[%s219 + $0x40] sm:%s212]
                  %238 = vst [vmem:[%s220 + $0x20] sm:%s212] %v237
                  %v239 = vld [vmem:[%s219 + $0x48] sm:%s212]
                  %240 = vst [vmem:[%s220 + $0x24] sm:%s212] %v239
                  %v241 = vld [vmem:[%s219 + $0x50] sm:%s212]
                  %242 = vst [vmem:[%s220 + $0x28] sm:%s212] %v241
                  %v243 = vld [vmem:[%s219 + $0x58] sm:%s212]
                  %244 = vst [vmem:[%s220 + $0x2c] sm:%s212] %v243
                  %v245 = vld [vmem:[%s219 + $0x60] sm:%s212]
                  %246 = vst [vmem:[%s220 + $0x30] sm:%s212] %v245
                  %v247 = vld [vmem:[%s219 + $0x68] sm:%s212]
                  %248 = vst [vmem:[%s220 + $0x34] sm:%s212] %v247
                  %v249 = vld [vmem:[%s219 + $0x70] sm:%s212]
                  %250 = vst [vmem:[%s220 + $0x38] sm:%s212] %v249
                  %v251 = vld [vmem:[%s219 + $0x78] sm:%s212]
                  %252 = vst [vmem:[%s220 + $0x3c] sm:%s212] %v251
                $region63: #{court_feature_aggregator.2} parent=50 // loop_footer
                  %s218 = sadd.s32 1, %s214
                $region64: #{court_feature_aggregator.2} parent=50 // loop_footer_branch
                  %213 = sbr.rel target = $region60
                $region65: #{court_feature_aggregator.2} parent=50 // loop_exit
                  _
              $region51: #{court_feature_aggregator.2} parent=35 // pred_fallthru
                _
            $region36: #{court_feature_aggregator.2} parent=31 // pred_fallthru
              _
            // Predicated region
            $region37: #{court_feature_aggregator.2} parent=31 // pred_check
              _
            $region38: #{court_feature_aggregator.2} parent=31 // pred_check_branch
              %158 = sbr.rel (0) target = $region40
            $region39: #{court_feature_aggregator.2} parent=31 // pred_region
              %s160 = ssub.s32 16, 1
              loop: start=0, step=1, limit=1
              $region41: #{court_feature_aggregator.2} parent=39 // loop_pre_header
                _
              $region42: #{court_feature_aggregator.2} parent=39 // loop_header
                %s162 = sphi 0, %s166
                %p163 = scmp.ge.s32.totalorder %s162, 1
                %s167 = sphi %s152, %s152
                %s168 = sphi %s148, %s148
              $region43: #{court_feature_aggregator.2} parent=39 // loop_header_branch
                %165 = sbr.rel (%p163) target = $region47
              $region44: #{court_feature_aggregator.2} parent=39 // loop_body
                %v169 = vld [vmem:[%s167] sm:%s160]
                %170 = vst [vmem:[%s168] sm:%s160] %v169
                %v171 = vld [vmem:[%s167 + $0x8] sm:%s160]
                %172 = vst [vmem:[%s168 + $0x4] sm:%s160] %v171
                %v173 = vld [vmem:[%s167 + $0x10] sm:%s160]
                %174 = vst [vmem:[%s168 + $0x8] sm:%s160] %v173
                %v175 = vld [vmem:[%s167 + $0x18] sm:%s160]
                %176 = vst [vmem:[%s168 + $0xc] sm:%s160] %v175
                %v177 = vld [vmem:[%s167 + $0x20] sm:%s160]
                %178 = vst [vmem:[%s168 + $0x10] sm:%s160] %v177
                %v179 = vld [vmem:[%s167 + $0x28] sm:%s160]
                %180 = vst [vmem:[%s168 + $0x14] sm:%s160] %v179
                %v181 = vld [vmem:[%s167 + $0x30] sm:%s160]
                %182 = vst [vmem:[%s168 + $0x18] sm:%s160] %v181
                %v183 = vld [vmem:[%s167 + $0x38] sm:%s160]
                %184 = vst [vmem:[%s168 + $0x1c] sm:%s160] %v183
                %v185 = vld [vmem:[%s167 + $0x40] sm:%s160]
                %186 = vst [vmem:[%s168 + $0x20] sm:%s160] %v185
                %v187 = vld [vmem:[%s167 + $0x48] sm:%s160]
                %188 = vst [vmem:[%s168 + $0x24] sm:%s160] %v187
                %v189 = vld [vmem:[%s167 + $0x50] sm:%s160]
                %190 = vst [vmem:[%s168 + $0x28] sm:%s160] %v189
                %v191 = vld [vmem:[%s167 + $0x58] sm:%s160]
                %192 = vst [vmem:[%s168 + $0x2c] sm:%s160] %v191
                %v193 = vld [vmem:[%s167 + $0x60] sm:%s160]
                %194 = vst [vmem:[%s168 + $0x30] sm:%s160] %v193
                %v195 = vld [vmem:[%s167 + $0x68] sm:%s160]
                %196 = vst [vmem:[%s168 + $0x34] sm:%s160] %v195
                %v197 = vld [vmem:[%s167 + $0x70] sm:%s160]
                %198 = vst [vmem:[%s168 + $0x38] sm:%s160] %v197
                %v199 = vld [vmem:[%s167 + $0x78] sm:%s160]
                %200 = vst [vmem:[%s168 + $0x3c] sm:%s160] %v199
              $region45: #{court_feature_aggregator.2} parent=39 // loop_footer
                %s166 = sadd.s32 1, %s162
              $region46: #{court_feature_aggregator.2} parent=39 // loop_footer_branch
                %161 = sbr.rel target = $region42
              $region47: #{court_feature_aggregator.2} parent=39 // loop_exit
                _
            $region40: #{court_feature_aggregator.2} parent=31 // pred_fallthru
              _
          $region32: #{court_feature_aggregator.2} parent=27 // pred_fallthru
            _
          %253 = vnop
        $region28: #{court_feature_aggregator.2} parent=23 // pred_fallthru
          _
      $region24: #{court_feature_aggregator.2} parent=5 // pred_fallthru
        _
      %p254 = scmp.le.s32.totalorder 1, %s9
      %p255 = scmp.lt.s32.totalorder %s9, 5
      %p256 = pnand %p254, %p255
      %p257 = pneg %p256
      // Predicated region
      $region66: #{court_feature_aggregator.2} parent=5 // pred_check
        _
      $region67: #{court_feature_aggregator.2} parent=5 // pred_check_branch
        %259 = sbr.rel (%p256) target = $region69
      $region68: #{court_feature_aggregator.2} parent=5 // pred_region
        %s260 = ssub.s32 %s9, 1
        %s261 = sand.u32 %s36, 1
        %s262 = sand.u32 %s36, 1
        %s263 = smul.addr %s262, 64
        %s264 = scalar_lea.vmem [#allocation2], %s263
        // Predicated region
        $region70: #{court_feature_aggregator.2} parent=68 // pred_check
          %p265 = pneg %p49
        $region71: #{court_feature_aggregator.2} parent=68 // pred_check_branch
          %267 = sbr.rel (%p265) target = $region73
        $region72: #{court_feature_aggregator.2} parent=68 // pred_region
          _
        $region73: #{court_feature_aggregator.2} parent=68 // pred_fallthru
          _
        %s268 = sand.u32 %s36, 1
        %s269 = sand.u32 %s36, 1
        %s270 = smul.addr %s269, 64
        %s271 = scalar_lea.vmem [#allocation2], %s270
        %p272 = pneg %p49
        %p273 = pneg %p46
        %p274 = pneg %p70
        %p275 = pneg %p67
        %p276 = pneg %p91
        %p277 = pneg %p88
        %p278 = pneg %p117
        %p279 = pneg %p114
        %p280 = scmp.lt.s32.totalorder %s18, 1
        %s281 = scalar_select %p280, %s18, 1
        %s282 = smul.addr %s281, 2
        %s283 = smul.addr %s282, 8
        %s284 = scalar_lea.vmem %s3, %s283
        %p285 = scmp.lt.s32.totalorder %s18, 1
        %s286 = scalar_select %p285, %s18, 1
        %s287 = smul.addr %s286, 2
        %s288 = smul.addr %s287, 8
        %s289 = scalar_lea.vmem %s3, %s288
        %p290 = scmp.eq.s32.totalorder %s19, 0
        // Predicated region
        $region74: #{court_feature_aggregator.2} parent=68 // pred_check
          %p291 = pneg %p290
        $region75: #{court_feature_aggregator.2} parent=68 // pred_check_branch
          %293 = sbr.rel (%p291) target = $region77
        $region76: #{court_feature_aggregator.2} parent=68 // pred_region
          %vm294 = vcmask 15360
          %295 = vst.msk [vmem:[%s289] sm:$0xff] %vm294, 0.0
          %296 = vst.msk [vmem:[%s289 + $0x8] sm:$0xff] %vm294, 0.0
        $region77: #{court_feature_aggregator.2} parent=68 // pred_fallthru
          _
        %v297 = vld [vmem:[%s1] sm:$0xf]
        %v298 = vld [vmem:[%s1 + $0x4] sm:$0xf]
        %v299 = vld [vmem:[%s264] sm:$0xf]
        %v300 = vld [vmem:[%s264 + $0x4] sm:$0xf]
        %v301 = vld [vmem:[%s264 + $0x8] sm:$0xf]
        %v302 = vld [vmem:[%s264 + $0xc] sm:$0xf]
        %v303 = vld [vmem:[%s264 + $0x10] sm:$0xf]
        %v304 = vld [vmem:[%s264 + $0x14] sm:$0xf]
        %v305 = vld [vmem:[%s264 + $0x18] sm:$0xf]
        %v306 = vld [vmem:[%s264 + $0x1c] sm:$0xf]
        %v307 = vld [vmem:[%s264 + $0x20] sm:$0xf]
        %v308 = vld [vmem:[%s264 + $0x24] sm:$0xf]
        %v309 = vld [vmem:[%s264 + $0x28] sm:$0xf]
        %v310 = vld [vmem:[%s264 + $0x2c] sm:$0xf]
        %v311 = vld [vmem:[%s264 + $0x30] sm:$0xf]
        %v312 = vld [vmem:[%s264 + $0x34] sm:$0xf]
        %v313 = vld [vmem:[%s264 + $0x38] sm:$0xf]
        %v314 = vld [vmem:[%s264 + $0x3c] sm:$0xf]
        %v315 = vld [vmem:[%s2] sm:$0xff]
        %v316 = vld [vmem:[%s2 + $0x8] sm:$0xff]
        %318 = vset.pattern.permute.xlu0 0
        %319 = vperm.xlu0 %318, %v315
        %v320 = vpop.permute.xlu0 %319
        %323 = vset.pattern.permute.xlu0 0
        %324 = vperm.xlu0 %323, %v316
        %v325 = vpop.permute.xlu0 %324
        %v329 = vunpack.c.l.b16 %v297
        %v330 = vunpack.c.l.b16 %v298
        %v331 = vpack.c.b16 %v330, %v329
        %v349 = vunpack.c.l.b16 %v299
        %v350 = vunpack.c.l.b16 %v300
        %v351 = vunpack.c.l.b16 %v301
        %v352 = vunpack.c.l.b16 %v302
        %v353 = vunpack.c.l.b16 %v303
        %v354 = vunpack.c.l.b16 %v304
        %v355 = vunpack.c.l.b16 %v305
        %v356 = vunpack.c.l.b16 %v306
        %v357 = vunpack.c.l.b16 %v307
        %v358 = vunpack.c.l.b16 %v308
        %v359 = vunpack.c.l.b16 %v309
        %v360 = vunpack.c.l.b16 %v310
        %v361 = vunpack.c.l.b16 %v311
        %v362 = vunpack.c.l.b16 %v312
        %v363 = vunpack.c.l.b16 %v313
        %v364 = vunpack.c.l.b16 %v314
        %v365 = vpack.c.b16 %v350, %v349
        %v366 = vpack.c.b16 %v352, %v351
        %v367 = vpack.c.b16 %v354, %v353
        %v368 = vpack.c.b16 %v356, %v355
        %v369 = vpack.c.b16 %v358, %v357
        %v370 = vpack.c.b16 %v360, %v359
        %v371 = vpack.c.b16 %v362, %v361
        %v372 = vpack.c.b16 %v364, %v363
        %381 = vmatpush.bf16.msra.mxu0 %v372
        %382 = vmatpush.bf16.msra.mxu0 %v371
        %383 = vmatpush.bf16.msra.mxu0 %v370
        %384 = vmatpush.bf16.msra.mxu0 %v369
        %385 = vmatpush.bf16.msra.mxu0 %v368
        %386 = vmatpush.bf16.msra.mxu0 %v367
        %387 = vmatpush.bf16.msra.mxu0 %v366
        %388 = vmatpush.bf16.msra.mxu0 %v365
        %389 = vmatmul.bf16.gmra.mxu0 %v331
        %v390 = vpop.f32.mrf.mxu0
        %v391 = vadd.f32 %v320, %v390
        %v392 = vpop.f32.mrf.mxu0
        %v393 = vadd.f32 %v325, %v392
        %394 = vdwg.mxu0
        %v395 = vld [vmem:[%s289] sm:$0xff]
        %v396 = vld [vmem:[%s289 + $0x8] sm:$0xff]
        %397 = vadd.xlane.f32.xlu0 %v391
        %v398 = vpop.xlane.xlu0 %397
        %399 = vadd.xlane.f32.xlu0 %v393
        %v400 = vpop.xlane.xlu0 %399
        %v401 = vadd.f32 %v395, %v398
        %v402 = vadd.f32 %v396, %v400
        %vm403 = vcmask 7168
        %404 = vst.msk [vmem:[%s289] sm:$0xff] %vm403, %v401
        %405 = vst.msk [vmem:[%s289 + $0x8] sm:$0xff] %vm403, %v402
        %v406 = vld [vmem:[%s289] sm:$0xff]
        %v407 = vld [vmem:[%s289 + $0x8] sm:$0xff]
        %v408 = vmul.f32 %v391, %v391
        %v409 = vmul.f32 %v393, %v393
        %410 = vadd.xlane.f32.xlu0 %v408
        %v411 = vpop.xlane.xlu0 %410
        %412 = vadd.xlane.f32.xlu0 %v409
        %v413 = vpop.xlane.xlu0 %412
        %v414 = vadd.f32 %v406, %v411
        %v415 = vadd.f32 %v407, %v413
        %vm416 = vcmask 15368
        %417 = vst.msk [vmem:[%s289] sm:$0xff] %vm416, %v414
        %418 = vst.msk [vmem:[%s289 + $0x8] sm:$0xff] %vm416, %v415
        %p419 = scmp.lt.s32.totalorder %s18, 1
        %s420 = scalar_select %p419, %s18, 1
        %s421 = smul.addr %s420, 2
        %s422 = smul.addr %s421, 8
        %s423 = scalar_lea.vmem %s3, %s422
        // Predicated region
        $region78: #{court_feature_aggregator.2} parent=68 // pred_check
          %p424 = pneg %p114
        $region79: #{court_feature_aggregator.2} parent=68 // pred_check_branch
          %426 = sbr.rel (%p424) target = $region81
        $region80: #{court_feature_aggregator.2} parent=68 // pred_region
          _
        $region81: #{court_feature_aggregator.2} parent=68 // pred_fallthru
          _
      $region69: #{court_feature_aggregator.2} parent=5 // pred_fallthru
        _
      %p427 = scmp.le.s32.totalorder 2, %s9
      // Predicated region
      $region82: #{court_feature_aggregator.2} parent=5 // pred_check
        %p428 = pneg %p427
      $region83: #{court_feature_aggregator.2} parent=5 // pred_check_branch
        %430 = sbr.rel (%p428) target = $region85
      $region84: #{court_feature_aggregator.2} parent=5 // pred_region
        %s431 = ssub.s32 %s9, 2
        // Predicated region
        $region86: #{court_feature_aggregator.2} parent=84 // pred_check
          %p432 = pneg %p120
        $region87: #{court_feature_aggregator.2} parent=84 // pred_check_branch
          %434 = sbr.rel (%p432) target = $region89
        $region88: #{court_feature_aggregator.2} parent=84 // pred_region
          %p435 = scmp.lt.s32.totalorder %s20, 1
          %s436 = scalar_select %p435, %s20, 1
          %s437 = smul.addr %s436, 2
          %s438 = smul.addr %s437, 8
          %s439 = scalar_lea.vmem %s3, %s438
        $region89: #{court_feature_aggregator.2} parent=84 // pred_fallthru
          _
      $region85: #{court_feature_aggregator.2} parent=5 // pred_fallthru
        _
    $region6: #{court_feature_aggregator.2} parent=1 // loop_footer
      %s13 = sadd.s32 1, %s9
    $region7: #{court_feature_aggregator.2} parent=1 // loop_footer_branch
      %8 = sbr.rel target = $region3
    $region8: #{court_feature_aggregator.2} parent=1 // loop_exit
      _

// kernel: court_feature_aggregator.3
$region0: #{court_feature_aggregator.3}
  #allocation0 [shape = 'u32[]', space=smem, size = 0x4, offset = 0x4, fixed_abs, tag = 'smem constant byte address 0x4 - core index']
  #allocation1 [shape = 'u32[72,128]{1,0:T(1,128)}', space=vmem, size = 0x9000, scoped, tag = 'internal scratch']
  %s0 = inlined_call_operand.vmem [shape: bf16[2,128,256], index: 0, kind: input, shape index: {}]
  %s1 = inlined_call_operand.vmem [shape: bf16[16,128], index: 1, kind: input, shape index: {}]
  %s2 = inlined_call_operand.vmem [shape: f32[16,1], index: 2, kind: input, shape index: {}]
  %s3 = inlined_call_operand.vmem [shape: f32[16,1], index: 3, kind: input, shape index: {}]
  %s4 = inlined_call_operand.vmem [shape: f32[16,1], index: 4, kind: input, shape index: {}]
  %s5 = inlined_call_operand.vmem [shape: f32[2,16,256], index: 5, kind: output, shape index: {}]
  %s6 = sld [smem:[#allocation0]]
  $region128: #{court_feature_aggregator.3} parent=0
    _
  %s8 = ssub.s32 1, %s6
  %s9 = scalar_select 0, %s8, %s6
  $region1: #{court_feature_aggregator.3} parent=0
    #allocation2 [shape = 'u8[65536]{0}', space=vmem, size = 0x10000, scoped, tag = 'input window, operand 0']
    #allocation3 [shape = 'u8[16384]{0}', space=vmem, size = 0x4000, scoped, tag = 'output window, operand 0']
    loop: start=0, step=1, limit=6
    $region2: #{court_feature_aggregator.3} parent=1 // loop_pre_header
      _
    $region3: #{court_feature_aggregator.3} parent=1 // loop_header
      %s11 = sphi 0, %s15
      %p12 = scmp.ge.s32.totalorder %s11, 6
      %s18 = sphi 0, %s30
      %s19 = sphi 0, %s26
      %s20 = sphi 0, %s18
      %s21 = sphi 0, %s19
      %s22 = sphi 0, %s20
      %s23 = sphi 0, %s21
      %s35 = sphi 0, %s37
      %s38 = sphi 0, %s35
      %s39 = sphi 0, %s38
      %s55 = sphi 0, %s39
      %s59 = sphi 0, %s59
      %s61 = sphi 0, %s59
      %s62 = sphi 0, %s61
      %s76 = sphi 0, %s62
      %s80 = sphi 0, %s80
      %s82 = sphi 0, %s80
      %s83 = sphi 0, %s82
      %s97 = sphi 0, %s83
      %s101 = sphi 0, %s101
      %s103 = sphi 0, %s101
      %s104 = sphi 0, %s103
      %s118 = sphi 0, %s104
      %s122 = sphi 0, %s122
      %s124 = sphi 0, %s122
      %s125 = sphi 0, %s124
      %s139 = sphi 0, %s125
      %s147 = sphi 0, %s149
      %s150 = sphi 0, %s147
      %s151 = sphi 0, %s150
      %s167 = sphi 0, %s151
    $region4: #{court_feature_aggregator.3} parent=1 // loop_header_branch
      %14 = sbr.rel (%p12) target = $region8
    $region5: #{court_feature_aggregator.3} parent=1 // loop_body
      %s16 = ssub.s32 %s11, 1
      %s17 = ssub.s32 %s11, 2
      %s24 = sadd.s32 1, %s19
      %p25 = scmp.ge.s32.totalorder %s24, 2
      %s26 = scalar_select %p25, 0, %s24
      %s27 = sadd.s32 1, %s18
      %s28 = scalar_select %p25, %s27, %s18
      %p29 = scmp.ge.s32.totalorder %s28, 2
      %s30 = scalar_select %p29, 0, %s28
      %s31 = ssub.s32 %s18, %s30
      %s32 = ssub.s32 %s19, %s26
      %s33 = sor.u32 %s31, %s32
      %p34 = scmp.eq.s32.totalorder %s33, 0
      %s36 = sadd.s32 %s35, 1
      %s37 = scalar_select %p34, %s35, %s36
      %p40 = pneg %p34
      %p41 = scmp.eq.s32.totalorder %s11, 3
      %p42 = por %p40, %p41
      %p43 = scmp.ne.s32.totalorder %s35, %s38
      %p44 = scmp.eq.s32.totalorder %s11, 0
      %p45 = por %p43, %p44
      %p46 = scmp.ne.s32.totalorder %s35, %s38
      %p47 = scmp.eq.s32.totalorder %s16, 3
      %p48 = por %p46, %p47
      %p49 = scmp.ne.s32.totalorder %s38, %s39
      %p50 = scmp.eq.s32.totalorder %s16, 0
      %p51 = por %p49, %p50
      %p52 = scmp.ne.s32.totalorder %s38, %s39
      %p53 = scmp.eq.s32.totalorder %s17, 3
      %p54 = por %p52, %p53
      %p56 = scmp.ne.s32.totalorder %s39, %s55
      %p57 = scmp.eq.s32.totalorder %s17, 0
      %p58 = por %p56, %p57
      %s60 = sadd.s32 %s59, 1
      %p63 = scmp.eq.s32.totalorder %s11, 3
      %p64 = scmp.ne.s32.totalorder %s59, %s61
      %p65 = scmp.eq.s32.totalorder %s11, 0
      %p66 = por %p64, %p65
      %p67 = scmp.ne.s32.totalorder %s59, %s61
      %p68 = scmp.eq.s32.totalorder %s16, 3
      %p69 = por %p67, %p68
      %p70 = scmp.ne.s32.totalorder %s61, %s62
      %p71 = scmp.eq.s32.totalorder %s16, 0
      %p72 = por %p70, %p71
      %p73 = scmp.ne.s32.totalorder %s61, %s62
      %p74 = scmp.eq.s32.totalorder %s17, 3
      %p75 = por %p73, %p74
      %p77 = scmp.ne.s32.totalorder %s62, %s76
      %p78 = scmp.eq.s32.totalorder %s17, 0
      %p79 = por %p77, %p78
      %s81 = sadd.s32 %s80, 1
      %p84 = scmp.eq.s32.totalorder %s11, 3
      %p85 = scmp.ne.s32.totalorder %s80, %s82
      %p86 = scmp.eq.s32.totalorder %s11, 0
      %p87 = por %p85, %p86
      %p88 = scmp.ne.s32.totalorder %s80, %s82
      %p89 = scmp.eq.s32.totalorder %s16, 3
      %p90 = por %p88, %p89
      %p91 = scmp.ne.s32.totalorder %s82, %s83
      %p92 = scmp.eq.s32.totalorder %s16, 0
      %p93 = por %p91, %p92
      %p94 = scmp.ne.s32.totalorder %s82, %s83
      %p95 = scmp.eq.s32.totalorder %s17, 3
      %p96 = por %p94, %p95
      %p98 = scmp.ne.s32.totalorder %s83, %s97
      %p99 = scmp.eq.s32.totalorder %s17, 0
      %p100 = por %p98, %p99
      %s102 = sadd.s32 %s101, 1
      %p105 = scmp.eq.s32.totalorder %s11, 3
      %p106 = scmp.ne.s32.totalorder %s101, %s103
      %p107 = scmp.eq.s32.totalorder %s11, 0
      %p108 = por %p106, %p107
      %p109 = scmp.ne.s32.totalorder %s101, %s103
      %p110 = scmp.eq.s32.totalorder %s16, 3
      %p111 = por %p109, %p110
      %p112 = scmp.ne.s32.totalorder %s103, %s104
      %p113 = scmp.eq.s32.totalorder %s16, 0
      %p114 = por %p112, %p113
      %p115 = scmp.ne.s32.totalorder %s103, %s104
      %p116 = scmp.eq.s32.totalorder %s17, 3
      %p117 = por %p115, %p116
      %p119 = scmp.ne.s32.totalorder %s104, %s118
      %p120 = scmp.eq.s32.totalorder %s17, 0
      %p121 = por %p119, %p120
      %s123 = sadd.s32 %s122, 1
      %p126 = scmp.eq.s32.totalorder %s11, 3
      %p127 = scmp.ne.s32.totalorder %s122, %s124
      %p128 = scmp.eq.s32.totalorder %s11, 0
      %p129 = por %p127, %p128
      %p130 = scmp.ne.s32.totalorder %s122, %s124
      %p131 = scmp.eq.s32.totalorder %s16, 3
      %p132 = por %p130, %p131
      %p133 = scmp.ne.s32.totalorder %s124, %s125
      %p134 = scmp.eq.s32.totalorder %s16, 0
      %p135 = por %p133, %p134
      %p136 = scmp.ne.s32.totalorder %s124, %s125
      %p137 = scmp.eq.s32.totalorder %s17, 3
      %p138 = por %p136, %p137
      %p140 = scmp.ne.s32.totalorder %s125, %s139
      %p141 = scmp.eq.s32.totalorder %s17, 0
      %p142 = por %p140, %p141
      %s143 = ssub.s32 %s18, %s30
      %s144 = ssub.s32 %s19, %s26
      %s145 = sor.u32 %s143, %s144
      %p146 = scmp.eq.s32.totalorder %s145, 0
      %s148 = sadd.s32 %s147, 1
      %s149 = scalar_select %p146, %s147, %s148
      %p152 = pneg %p146
      %p153 = scmp.eq.s32.totalorder %s11, 3
      %p154 = por %p152, %p153
      %p155 = scmp.ne.s32.totalorder %s147, %s150
      %p156 = scmp.eq.s32.totalorder %s11, 0
      %p157 = por %p155, %p156
      %p158 = scmp.ne.s32.totalorder %s147, %s150
      %p159 = scmp.eq.s32.totalorder %s16, 3
      %p160 = por %p158, %p159
      %p161 = scmp.ne.s32.totalorder %s150, %s151
      %p162 = scmp.eq.s32.totalorder %s16, 0
      %p163 = por %p161, %p162
      %p164 = scmp.ne.s32.totalorder %s150, %s151
      %p165 = scmp.eq.s32.totalorder %s17, 3
      %p166 = por %p164, %p165
      %p168 = scmp.ne.s32.totalorder %s151, %s167
      %p169 = scmp.eq.s32.totalorder %s17, 0
      %p170 = por %p168, %p169
      %p171 = scmp.le.s32.totalorder 1, %s11
      %p172 = scmp.lt.s32.totalorder %s11, 5
      %p173 = pnand %p171, %p172
      %p174 = pneg %p173
      // Predicated region
      $region9: #{court_feature_aggregator.3} parent=5 // pred_check
        _
      $region10: #{court_feature_aggregator.3} parent=5 // pred_check_branch
        %176 = sbr.rel (%p173) target = $region12
      $region11: #{court_feature_aggregator.3} parent=5 // pred_region
        %s177 = ssub.s32 %s11, 1
        // Predicated region
        $region13: #{court_feature_aggregator.3} parent=11 // pred_check
          %p178 = pneg %p72
        $region14: #{court_feature_aggregator.3} parent=11 // pred_check_branch
          %180 = sbr.rel (%p178) target = $region16
        $region15: #{court_feature_aggregator.3} parent=11 // pred_region
          _
        $region16: #{court_feature_aggregator.3} parent=11 // pred_fallthru
          _
        // Predicated region
        $region17: #{court_feature_aggregator.3} parent=11 // pred_check
          %p181 = pneg %p93
        $region18: #{court_feature_aggregator.3} parent=11 // pred_check_branch
          %183 = sbr.rel (%p181) target = $region20
        $region19: #{court_feature_aggregator.3} parent=11 // pred_region
          _
        $region20: #{court_feature_aggregator.3} parent=11 // pred_fallthru
          _
        // Predicated region
        $region21: #{court_feature_aggregator.3} parent=11 // pred_check
          %p184 = pneg %p114
        $region22: #{court_feature_aggregator.3} parent=11 // pred_check_branch
          %186 = sbr.rel (%p184) target = $region24
        $region23: #{court_feature_aggregator.3} parent=11 // pred_region
          _
        $region24: #{court_feature_aggregator.3} parent=11 // pred_fallthru
          _
        // Predicated region
        $region25: #{court_feature_aggregator.3} parent=11 // pred_check
          %p187 = pneg %p135
        $region26: #{court_feature_aggregator.3} parent=11 // pred_check_branch
          %189 = sbr.rel (%p187) target = $region28
        $region27: #{court_feature_aggregator.3} parent=11 // pred_region
          _
        $region28: #{court_feature_aggregator.3} parent=11 // pred_fallthru
          _
      $region12: #{court_feature_aggregator.3} parent=5 // pred_fallthru
        _
      %p190 = scmp.lt.s32.totalorder %s11, 4
      // Predicated region
      $region29: #{court_feature_aggregator.3} parent=5 // pred_check
        %p191 = pneg %p190
      $region30: #{court_feature_aggregator.3} parent=5 // pred_check_branch
        %193 = sbr.rel (%p191) target = $region32
      $region31: #{court_feature_aggregator.3} parent=5 // pred_region
        // Predicated region
        $region33: #{court_feature_aggregator.3} parent=31 // pred_check
          %p194 = pneg %p45
        $region34: #{court_feature_aggregator.3} parent=31 // pred_check_branch
          %196 = sbr.rel (%p194) target = $region36
        $region35: #{court_feature_aggregator.3} parent=31 // pred_region
          %s197 = sand.u32 %s35, 1
          %s198 = sand.u32 %s35, 1
          %s199 = smul.addr %s198, 64
          %s200 = scalar_lea.vmem [#allocation2], %s199
          %s201 = smul.addr %s18, 32
          %s202 = sadd.s32 %s19, %s201
          %s203 = smul.addr %s202, 4
          %s204 = scalar_lea.vmem %s0, %s203
          // Predicated region
          $region37: #{court_feature_aggregator.3} parent=35 // pred_check
            _
          $region38: #{court_feature_aggregator.3} parent=35 // pred_check_branch
            %206 = sbr.rel (0) target = $region40
          $region39: #{court_feature_aggregator.3} parent=35 // pred_region
            // Predicated region
            $region41: #{court_feature_aggregator.3} parent=39 // pred_check
              _
            $region42: #{court_feature_aggregator.3} parent=39 // pred_check_branch
              %208 = sbr.rel target = $region44
            $region43: #{court_feature_aggregator.3} parent=39 // pred_region
              // Predicated region
              $region56: #{court_feature_aggregator.3} parent=43 // pred_check
                _
              $region57: #{court_feature_aggregator.3} parent=43 // pred_check_branch
                %254 = sbr.rel (0) target = $region59
              $region58: #{court_feature_aggregator.3} parent=43 // pred_region
                loop: start=0, step=1, limit=1
                $region60: #{court_feature_aggregator.3} parent=58 // loop_pre_header
                  _
                $region61: #{court_feature_aggregator.3} parent=58 // loop_header
                  %s256 = sphi 0, %s260
                  %p257 = scmp.ge.s32.totalorder %s256, 1
                  %s261 = sphi %s204, %s204
                  %s262 = sphi %s200, %s200
                $region62: #{court_feature_aggregator.3} parent=58 // loop_header_branch
                  %259 = sbr.rel (%p257) target = $region66
                $region63: #{court_feature_aggregator.3} parent=58 // loop_body
                  _
                $region64: #{court_feature_aggregator.3} parent=58 // loop_footer
                  %s260 = sadd.s32 1, %s256
                $region65: #{court_feature_aggregator.3} parent=58 // loop_footer_branch
                  %255 = sbr.rel target = $region61
                $region66: #{court_feature_aggregator.3} parent=58 // loop_exit
                  _
                %s264 = ssub.s32 16, 1
                loop: start=0, step=1, limit=1
                $region67: #{court_feature_aggregator.3} parent=58 // loop_pre_header
                  _
                $region68: #{court_feature_aggregator.3} parent=58 // loop_header
                  %s266 = sphi 0, %s270
                  %p267 = scmp.ge.s32.totalorder %s266, 1
                  %s271 = sphi %s204, %s204
                  %s272 = sphi %s200, %s200
                $region69: #{court_feature_aggregator.3} parent=58 // loop_header_branch
                  %269 = sbr.rel (%p267) target = $region73
                $region70: #{court_feature_aggregator.3} parent=58 // loop_body
                  %v273 = vld [vmem:[%s271] sm:%s264]
                  %274 = vst [vmem:[%s272] sm:%s264] %v273
                  %v275 = vld [vmem:[%s271 + $0x8] sm:%s264]
                  %276 = vst [vmem:[%s272 + $0x4] sm:%s264] %v275
                  %v277 = vld [vmem:[%s271 + $0x10] sm:%s264]
                  %278 = vst [vmem:[%s272 + $0x8] sm:%s264] %v277
                  %v279 = vld [vmem:[%s271 + $0x18] sm:%s264]
                  %280 = vst [vmem:[%s272 + $0xc] sm:%s264] %v279
                  %v281 = vld [vmem:[%s271 + $0x20] sm:%s264]
                  %282 = vst [vmem:[%s272 + $0x10] sm:%s264] %v281
                  %v283 = vld [vmem:[%s271 + $0x28] sm:%s264]
                  %284 = vst [vmem:[%s272 + $0x14] sm:%s264] %v283
                  %v285 = vld [vmem:[%s271 + $0x30] sm:%s264]
                  %286 = vst [vmem:[%s272 + $0x18] sm:%s264] %v285
                  %v287 = vld [vmem:[%s271 + $0x38] sm:%s264]
                  %288 = vst [vmem:[%s272 + $0x1c] sm:%s264] %v287
                  %v289 = vld [vmem:[%s271 + $0x40] sm:%s264]
                  %290 = vst [vmem:[%s272 + $0x20] sm:%s264] %v289
                  %v291 = vld [vmem:[%s271 + $0x48] sm:%s264]
                  %292 = vst [vmem:[%s272 + $0x24] sm:%s264] %v291
                  %v293 = vld [vmem:[%s271 + $0x50] sm:%s264]
                  %294 = vst [vmem:[%s272 + $0x28] sm:%s264] %v293
                  %v295 = vld [vmem:[%s271 + $0x58] sm:%s264]
                  %296 = vst [vmem:[%s272 + $0x2c] sm:%s264] %v295
                  %v297 = vld [vmem:[%s271 + $0x60] sm:%s264]
                  %298 = vst [vmem:[%s272 + $0x30] sm:%s264] %v297
                  %v299 = vld [vmem:[%s271 + $0x68] sm:%s264]
                  %300 = vst [vmem:[%s272 + $0x34] sm:%s264] %v299
                  %v301 = vld [vmem:[%s271 + $0x70] sm:%s264]
                  %302 = vst [vmem:[%s272 + $0x38] sm:%s264] %v301
                  %v303 = vld [vmem:[%s271 + $0x78] sm:%s264]
                  %304 = vst [vmem:[%s272 + $0x3c] sm:%s264] %v303
                $region71: #{court_feature_aggregator.3} parent=58 // loop_footer
                  %s270 = sadd.s32 1, %s266
                $region72: #{court_feature_aggregator.3} parent=58 // loop_footer_branch
                  %265 = sbr.rel target = $region68
                $region73: #{court_feature_aggregator.3} parent=58 // loop_exit
                  _
              $region59: #{court_feature_aggregator.3} parent=43 // pred_fallthru
                _
            $region44: #{court_feature_aggregator.3} parent=39 // pred_fallthru
              _
            // Predicated region
            $region45: #{court_feature_aggregator.3} parent=39 // pred_check
              _
            $region46: #{court_feature_aggregator.3} parent=39 // pred_check_branch
              %210 = sbr.rel (0) target = $region48
            $region47: #{court_feature_aggregator.3} parent=39 // pred_region
              %s212 = ssub.s32 16, 1
              loop: start=0, step=1, limit=1
              $region49: #{court_feature_aggregator.3} parent=47 // loop_pre_header
                _
              $region50: #{court_feature_aggregator.3} parent=47 // loop_header
                %s214 = sphi 0, %s218
                %p215 = scmp.ge.s32.totalorder %s214, 1
                %s219 = sphi %s204, %s204
                %s220 = sphi %s200, %s200
              $region51: #{court_feature_aggregator.3} parent=47 // loop_header_branch
                %217 = sbr.rel (%p215) target = $region55
              $region52: #{court_feature_aggregator.3} parent=47 // loop_body
                %v221 = vld [vmem:[%s219] sm:%s212]
                %222 = vst [vmem:[%s220] sm:%s212] %v221
                %v223 = vld [vmem:[%s219 + $0x8] sm:%s212]
                %224 = vst [vmem:[%s220 + $0x4] sm:%s212] %v223
                %v225 = vld [vmem:[%s219 + $0x10] sm:%s212]
                %226 = vst [vmem:[%s220 + $0x8] sm:%s212] %v225
                %v227 = vld [vmem:[%s219 + $0x18] sm:%s212]
                %228 = vst [vmem:[%s220 + $0xc] sm:%s212] %v227
                %v229 = vld [vmem:[%s219 + $0x20] sm:%s212]
                %230 = vst [vmem:[%s220 + $0x10] sm:%s212] %v229
                %v231 = vld [vmem:[%s219 + $0x28] sm:%s212]
                %232 = vst [vmem:[%s220 + $0x14] sm:%s212] %v231
                %v233 = vld [vmem:[%s219 + $0x30] sm:%s212]
                %234 = vst [vmem:[%s220 + $0x18] sm:%s212] %v233
                %v235 = vld [vmem:[%s219 + $0x38] sm:%s212]
                %236 = vst [vmem:[%s220 + $0x1c] sm:%s212] %v235
                %v237 = vld [vmem:[%s219 + $0x40] sm:%s212]
                %238 = vst [vmem:[%s220 + $0x20] sm:%s212] %v237
                %v239 = vld [vmem:[%s219 + $0x48] sm:%s212]
                %240 = vst [vmem:[%s220 + $0x24] sm:%s212] %v239
                %v241 = vld [vmem:[%s219 + $0x50] sm:%s212]
                %242 = vst [vmem:[%s220 + $0x28] sm:%s212] %v241
                %v243 = vld [vmem:[%s219 + $0x58] sm:%s212]
                %244 = vst [vmem:[%s220 + $0x2c] sm:%s212] %v243
                %v245 = vld [vmem:[%s219 + $0x60] sm:%s212]
                %246 = vst [vmem:[%s220 + $0x30] sm:%s212] %v245
                %v247 = vld [vmem:[%s219 + $0x68] sm:%s212]
                %248 = vst [vmem:[%s220 + $0x34] sm:%s212] %v247
                %v249 = vld [vmem:[%s219 + $0x70] sm:%s212]
                %250 = vst [vmem:[%s220 + $0x38] sm:%s212] %v249
                %v251 = vld [vmem:[%s219 + $0x78] sm:%s212]
                %252 = vst [vmem:[%s220 + $0x3c] sm:%s212] %v251
              $region53: #{court_feature_aggregator.3} parent=47 // loop_footer
                %s218 = sadd.s32 1, %s214
              $region54: #{court_feature_aggregator.3} parent=47 // loop_footer_branch
                %213 = sbr.rel target = $region50
              $region55: #{court_feature_aggregator.3} parent=47 // loop_exit
                _
            $region48: #{court_feature_aggregator.3} parent=39 // pred_fallthru
              _
          $region40: #{court_feature_aggregator.3} parent=35 // pred_fallthru
            _
          %305 = vnop
        $region36: #{court_feature_aggregator.3} parent=31 // pred_fallthru
          _
      $region32: #{court_feature_aggregator.3} parent=5 // pred_fallthru
        _
      %p306 = scmp.le.s32.totalorder 1, %s11
      %p307 = scmp.lt.s32.totalorder %s11, 5
      %p308 = pnand %p306, %p307
      %p309 = pneg %p308
      // Predicated region
      $region74: #{court_feature_aggregator.3} parent=5 // pred_check
        _
      $region75: #{court_feature_aggregator.3} parent=5 // pred_check_branch
        %311 = sbr.rel (%p308) target = $region77
      $region76: #{court_feature_aggregator.3} parent=5 // pred_region
        %s312 = ssub.s32 %s11, 1
        %s313 = sand.u32 %s38, 1
        %s314 = sand.u32 %s38, 1
        %s315 = smul.addr %s314, 64
        %s316 = scalar_lea.vmem [#allocation2], %s315
        // Predicated region
        $region78: #{court_feature_aggregator.3} parent=76 // pred_check
          %p317 = pneg %p51
        $region79: #{court_feature_aggregator.3} parent=76 // pred_check_branch
          %319 = sbr.rel (%p317) target = $region81
        $region80: #{court_feature_aggregator.3} parent=76 // pred_region
          _
        $region81: #{court_feature_aggregator.3} parent=76 // pred_fallthru
          _
        %s320 = sand.u32 %s38, 1
        %s321 = sand.u32 %s38, 1
        %s322 = smul.addr %s321, 64
        %s323 = scalar_lea.vmem [#allocation2], %s322
        %p324 = pneg %p51
        %p325 = pneg %p48
        %p326 = pneg %p72
        %p327 = pneg %p69
        %p328 = pneg %p93
        %p329 = pneg %p90
        %p330 = pneg %p114
        %p331 = pneg %p111
        %p332 = pneg %p135
        %p333 = pneg %p132
        %p334 = pneg %p163
        %p335 = pneg %p160
        %s336 = sand.u32 %s150, 1
        %s337 = sand.u32 %s150, 1
        %s338 = smul.addr %s337, 16
        %s339 = scalar_lea.vmem [#allocation3], %s338
        %v340 = vld [vmem:[%s1] sm:$0xf]
        %v341 = vld [vmem:[%s1 + $0x4] sm:$0xf]
        %v342 = vld [vmem:[%s316] sm:$0xf]
        %v343 = vld [vmem:[%s316 + $0x4] sm:$0xf]
        %v344 = vld [vmem:[%s316 + $0x8] sm:$0xf]
        %v345 = vld [vmem:[%s316 + $0xc] sm:$0xf]
        %v346 = vld [vmem:[%s316 + $0x10] sm:$0xf]
        %v347 = vld [vmem:[%s316 + $0x14] sm:$0xf]
        %v348 = vld [vmem:[%s316 + $0x18] sm:$0xf]
        %v349 = vld [vmem:[%s316 + $0x1c] sm:$0xf]
        %v350 = vld [vmem:[%s316 + $0x20] sm:$0xf]
        %v351 = vld [vmem:[%s316 + $0x24] sm:$0xf]
        %v352 = vld [vmem:[%s316 + $0x28] sm:$0xf]
        %v353 = vld [vmem:[%s316 + $0x2c] sm:$0xf]
        %v354 = vld [vmem:[%s316 + $0x30] sm:$0xf]
        %v355 = vld [vmem:[%s316 + $0x34] sm:$0xf]
        %v356 = vld [vmem:[%s316 + $0x38] sm:$0xf]
        %v357 = vld [vmem:[%s316 + $0x3c] sm:$0xf]
        %v358 = vld [vmem:[%s2] sm:$0xff]
        %v359 = vld [vmem:[%s2 + $0x8] sm:$0xff]
        %361 = vset.pattern.permute.xlu0 0
        %362 = vperm.xlu0 %361, %v358
        %v363 = vpop.permute.xlu0 %362
        %366 = vset.pattern.permute.xlu0 0
        %367 = vperm.xlu0 %366, %v359
        %v368 = vpop.permute.xlu0 %367
        %v372 = vunpack.c.l.b16 %v340
        %v373 = vunpack.c.l.b16 %v341
        %v374 = vpack.c.b16 %v373, %v372
        %v392 = vunpack.c.l.b16 %v342
        %v393 = vunpack.c.l.b16 %v343
        %v394 = vunpack.c.l.b16 %v344
        %v395 = vunpack.c.l.b16 %v345
        %v396 = vunpack.c.l.b16 %v346
        %v397 = vunpack.c.l.b16 %v347
        %v398 = vunpack.c.l.b16 %v348
        %v399 = vunpack.c.l.b16 %v349
        %v400 = vunpack.c.l.b16 %v350
        %v401 = vunpack.c.l.b16 %v351
        %v402 = vunpack.c.l.b16 %v352
        %v403 = vunpack.c.l.b16 %v353
        %v404 = vunpack.c.l.b16 %v354
        %v405 = vunpack.c.l.b16 %v355
        %v406 = vunpack.c.l.b16 %v356
        %v407 = vunpack.c.l.b16 %v357
        %v408 = vpack.c.b16 %v393, %v392
        %v409 = vpack.c.b16 %v395, %v394
        %v410 = vpack.c.b16 %v397, %v396
        %v411 = vpack.c.b16 %v399, %v398
        %v412 = vpack.c.b16 %v401, %v400
        %v413 = vpack.c.b16 %v403, %v402
        %v414 = vpack.c.b16 %v405, %v404
        %v415 = vpack.c.b16 %v407, %v406
        %424 = vmatpush.bf16.msra.mxu0 %v415
        %425 = vmatpush.bf16.msra.mxu0 %v414
        %426 = vmatpush.bf16.msra.mxu0 %v413
        %427 = vmatpush.bf16.msra.mxu0 %v412
        %428 = vmatpush.bf16.msra.mxu0 %v411
        %429 = vmatpush.bf16.msra.mxu0 %v410
        %430 = vmatpush.bf16.msra.mxu0 %v409
        %431 = vmatpush.bf16.msra.mxu0 %v408
        %432 = vmatmul.bf16.gmra.mxu0 %v374
        %v433 = vpop.f32.mrf.mxu0
        %v434 = vadd.f32 %v363, %v433
        %v435 = vpop.f32.mrf.mxu0
        %v436 = vadd.f32 %v368, %v435
        %437 = vdwg.mxu0
        %v438 = vld [vmem:[%s3] sm:$0xff]
        %v439 = vld [vmem:[%s3 + $0x8] sm:$0xff]
        %441 = vset.pattern.permute.xlu0 0
        %442 = vperm.xlu0 %441, %v438
        %v443 = vpop.permute.xlu0 %442
        %446 = vset.pattern.permute.xlu0 0
        %447 = vperm.xlu0 %446, %v439
        %v448 = vpop.permute.xlu0 %447
        %v450 = vmul.f32 %v434, %v443
        %v451 = vmul.f32 %v436, %v448
        %v452 = vld [vmem:[%s4] sm:$0xff]
        %v453 = vld [vmem:[%s4 + $0x8] sm:$0xff]
        %455 = vset.pattern.permute.xlu0 0
        %456 = vperm.xlu0 %455, %v452
        %v457 = vpop.permute.xlu0 %456
        %460 = vset.pattern.permute.xlu0 0
        %461 = vperm.xlu0 %460, %v453
        %v462 = vpop.permute.xlu0 %461
        %v464 = vadd.f32 %v450, %v457
        %v465 = vadd.f32 %v451, %v462
        %v466 = vxor.u32 %v464, 2147483648
        %v467 = vxor.u32 %v465, 2147483648
        %v468 = vmul.f32 %v466, 1.442695
        %v469 = vpow.pop %v468
        %v470 = vmul.f32 %v467, 1.442695
        %v471 = vpow.pop %v470
        %v472 = vadd.f32 %v469, 1.0
        %v473 = vadd.f32 %v471, 1.0
        %v474 = vrcp.pop %v472
        %v475 = vmul.f32 %v472, %v474
        %v476 = vsub.f32 1.0, %v475
        %v477 = vmul.f32 %v474, %v476
        %v478 = vadd.f32 %v474, %v477
        %vm479 = vweird.f32 %v472
        %vm480 = vweird.f32 %v474
        %vm481 = vmor %vm479, %vm480
        %v482 = vsel %vm481, %v474, %v478
        %v483 = vand.u32 2147483647, %v472
        %vm484 = vcmp.eq.f32.partialorder %v483, 8.507059e+37
        %v485 = vand.u32 %v472, 2147483648
        %v486 = vor.u32 1.1754944e-38, %v485
        %v487 = vsel %vm484, %v486, %v482
        %v488 = vmul.f32 1.0, %v487
        %v489 = vrcp.pop %v473
        %v490 = vmul.f32 %v473, %v489
        %v491 = vsub.f32 1.0, %v490
        %v492 = vmul.f32 %v489, %v491
        %v493 = vadd.f32 %v489, %v492
        %vm494 = vweird.f32 %v473
        %vm495 = vweird.f32 %v489
        %vm496 = vmor %vm494, %vm495
        %v497 = vsel %vm496, %v489, %v493
        %v498 = vand.u32 2147483647, %v473
        %vm499 = vcmp.eq.f32.partialorder %v498, 8.507059e+37
        %v500 = vand.u32 %v473, 2147483648
        %v501 = vor.u32 1.1754944e-38, %v500
        %v502 = vsel %vm499, %v501, %v497
        %v503 = vmul.f32 1.0, %v502
        %v504 = vmul.f32 %v464, %v488
        %v505 = vmul.f32 %v465, %v503
        %506 = vst [vmem:[%s339] sm:$0xff] %v504
        %507 = vst [vmem:[%s339 + $0x8] sm:$0xff] %v505
        %s508 = sand.u32 %s150, 1
        %s509 = sand.u32 %s150, 1
        %s510 = smul.addr %s509, 16
        %s511 = scalar_lea.vmem [#allocation3], %s510
        // Predicated region
        $region82: #{court_feature_aggregator.3} parent=76 // pred_check
          %p512 = pneg %p160
        $region83: #{court_feature_aggregator.3} parent=76 // pred_check_branch
          %514 = sbr.rel (%p512) target = $region85
        $region84: #{court_feature_aggregator.3} parent=76 // pred_region
          %s515 = smul.addr %s20, 4
          %s516 = sadd.s32 %s21, %s515
          %s517 = smul.addr %s516, 8
          %s518 = scalar_lea.vmem %s5, %s517
          // Predicated region
          $region86: #{court_feature_aggregator.3} parent=84 // pred_check
            _
          $region87: #{court_feature_aggregator.3} parent=84 // pred_check_branch
            %520 = sbr.rel (0) target = $region89
          $region88: #{court_feature_aggregator.3} parent=84 // pred_region
            // Predicated region
            $region90: #{court_feature_aggregator.3} parent=88 // pred_check
              _
            $region91: #{court_feature_aggregator.3} parent=88 // pred_check_branch
              %522 = sbr.rel (0) target = $region93
            $region92: #{court_feature_aggregator.3} parent=88 // pred_region
              // Predicated region
              $region105: #{court_feature_aggregator.3} parent=92 // pred_check
                _
              $region106: #{court_feature_aggregator.3} parent=92 // pred_check_branch
                %540 = sbr.rel (0) target = $region108
              $region107: #{court_feature_aggregator.3} parent=92 // pred_region
                loop: start=0, step=1, limit=1
                $region109: #{court_feature_aggregator.3} parent=107 // loop_pre_header
                  _
                $region110: #{court_feature_aggregator.3} parent=107 // loop_header
                  %s542 = sphi 0, %s546
                  %p543 = scmp.ge.s32.totalorder %s542, 1
                  %s547 = sphi %s511, %s511
                  %s548 = sphi %s518, %s518
                $region111: #{court_feature_aggregator.3} parent=107 // loop_header_branch
                  %545 = sbr.rel (%p543) target = $region115
                $region112: #{court_feature_aggregator.3} parent=107 // loop_body
                  %v549 = vld [vmem:[%s547] sm:$0xff]
                  %550 = vst [vmem:[%s548] sm:$0xff] %v549
                  %v551 = vld [vmem:[%s547 + $0x8] sm:$0xff]
                  %552 = vst [vmem:[%s548 + $0x10] sm:$0xff] %v551
                $region113: #{court_feature_aggregator.3} parent=107 // loop_footer
                  %s546 = sadd.s32 1, %s542
                $region114: #{court_feature_aggregator.3} parent=107 // loop_footer_branch
                  %541 = sbr.rel target = $region110
                $region115: #{court_feature_aggregator.3} parent=107 // loop_exit
                  _
              $region108: #{court_feature_aggregator.3} parent=92 // pred_fallthru
                _
              // Predicated region
              $region116: #{court_feature_aggregator.3} parent=92 // pred_check
                _
              $region117: #{court_feature_aggregator.3} parent=92 // pred_check_branch
                %554 = sbr.rel target = $region119
              $region118: #{court_feature_aggregator.3} parent=92 // pred_region
                _
              $region119: #{court_feature_aggregator.3} parent=92 // pred_fallthru
                _
            $region93: #{court_feature_aggregator.3} parent=88 // pred_fallthru
              _
            // Predicated region
            $region94: #{court_feature_aggregator.3} parent=88 // pred_check
              _
            $region95: #{court_feature_aggregator.3} parent=88 // pred_check_branch
              %524 = sbr.rel target = $region97
            $region96: #{court_feature_aggregator.3} parent=88 // pred_region
              %s526 = ssub.s32 256, 1
              loop: start=0, step=1, limit=1
              $region98: #{court_feature_aggregator.3} parent=96 // loop_pre_header
                _
              $region99: #{court_feature_aggregator.3} parent=96 // loop_header
                %s528 = sphi 0, %s532
                %p529 = scmp.ge.s32.totalorder %s528, 1
                %s533 = sphi %s511, %s511
                %s534 = sphi %s518, %s518
              $region100: #{court_feature_aggregator.3} parent=96 // loop_header_branch
                %531 = sbr.rel (%p529) target = $region104
              $region101: #{court_feature_aggregator.3} parent=96 // loop_body
                %v535 = vld [vmem:[%s533] sm:%s526]
                %536 = vst [vmem:[%s534] sm:%s526] %v535
                %v537 = vld [vmem:[%s533 + $0x8] sm:%s526]
                %538 = vst [vmem:[%s534 + $0x10] sm:%s526] %v537
              $region102: #{court_feature_aggregator.3} parent=96 // loop_footer
                %s532 = sadd.s32 1, %s528
              $region103: #{court_feature_aggregator.3} parent=96 // loop_footer_branch
                %527 = sbr.rel target = $region99
              $region104: #{court_feature_aggregator.3} parent=96 // loop_exit
                _
            $region97: #{court_feature_aggregator.3} parent=88 // pred_fallthru
              _
          $region89: #{court_feature_aggregator.3} parent=84 // pred_fallthru
            _
          %555 = vnop
        $region85: #{court_feature_aggregator.3} parent=76 // pred_fallthru
          _
      $region77: #{court_feature_aggregator.3} parent=5 // pred_fallthru
        _
      %p556 = scmp.le.s32.totalorder 2, %s11
      // Predicated region
      $region120: #{court_feature_aggregator.3} parent=5 // pred_check
        %p557 = pneg %p556
      $region121: #{court_feature_aggregator.3} parent=5 // pred_check_branch
        %559 = sbr.rel (%p557) target = $region123
      $region122: #{court_feature_aggregator.3} parent=5 // pred_region
        %s560 = ssub.s32 %s11, 2
        // Predicated region
        $region124: #{court_feature_aggregator.3} parent=122 // pred_check
          %p561 = pneg %p166
        $region125: #{court_feature_aggregator.3} parent=122 // pred_check_branch
          %563 = sbr.rel (%p561) target = $region127
        $region126: #{court_feature_aggregator.3} parent=122 // pred_region
          %s564 = sand.u32 %s151, 1
          %s565 = sand.u32 %s151, 1
          %s566 = smul.addr %s565, 16
          %s567 = scalar_lea.vmem [#allocation3], %s566
        $region127: #{court_feature_aggregator.3} parent=122 // pred_fallthru
          _
      $region123: #{court_feature_aggregator.3} parent=5 // pred_fallthru
        _
    $region6: #{court_feature_aggregator.3} parent=1 // loop_footer
      %s15 = sadd.s32 1, %s11
    $region7: #{court_feature_aggregator.3} parent=1 // loop_footer_branch
      %10 = sbr.rel target = $region3
    $region8: #{court_feature_aggregator.3} parent=1 // loop_exit
      _

</llo_original>
